<compile_context>
chip_gen: v5e
topology: v5e:2x2
jax: 0.10.0
libtpu: 0.0.40
codegen_flags: <defaults>
</compile_context>

<pallas_src>
import functools

import jax
import jax.numpy as jnp
from jax.experimental import pallas as pl
from jax.experimental.pallas import tpu as pltpu


def _bce_dice_kernel(x_ref, t_ref, ce_ref, it_ref, si_ref, st_ref, *,
                     inv_ce_den, hw, hw_tile):
    """Grid = (NB, P, T).  Each step processes one (bn, C, hw_tile) tile.

    Accumulates, per sample and per HW-split p, the four partial sums
        ce (pre-scaled by 1/(N*HW)), sum(sig*t), sum(sig), sum(t)
    directly into the resident output blocks; the nonlinear dice combine is done
    in the (tiny) wrapper epilogue so the P split stays an exact reduction.
    """
    p = pl.program_id(1)
    t_idx = pl.program_id(2)
    tiles_per_p = pl.num_programs(2)

    # Stream native dtype from HBM; compute in f32.
    x = x_ref[...].astype(jnp.float32)    # (bn, C, hw_tile) logits
    tg = t_ref[...].astype(jnp.float32)   # (bn, C, hw_tile) probability targets

    # Remainder mask: only compiled when hw_tile does not divide HW.
    masked = (hw % hw_tile) != 0
    if masked:
        col = jax.lax.broadcasted_iota(jnp.int32, x.shape, 2)
        start = (p * tiles_per_p + t_idx) * hw_tile
        valid = (start + col) < hw
        # NOTE: x must be zeroed before the softmax (garbage OOB logits -> inf/NaN).
        x = jnp.where(valid, x, 0.0)
        tg = jnp.where(valid, tg, 0.0)

    # --- cross-entropy with probability targets: -sum_c t * log_softmax(x, axis=C)
    m = jnp.max(x, axis=1, keepdims=True)                        # (bn, 1, hw_tile)
    z = x - m
    lse = jnp.log(jnp.sum(jnp.exp(z), axis=1, keepdims=True))    # (bn, 1, hw_tile)
    logp = z - lse                                               # (bn, C, hw_tile)
    tlp = tg * logp
    ce_part = -jnp.sum(jnp.sum(tlp, axis=2, keepdims=True),
                       axis=1, keepdims=True) * inv_ce_den       # (bn, 1, 1), O(1)

    # --- soft dice partial sums on sigmoid(logits), via tanh (1 EUP op, overflow-safe)
    sig = 0.5 * jnp.tanh(0.5 * x) + 0.5                          # (bn, C, hw_tile)
    if masked:
        sig = jnp.where(valid, sig, 0.0)                         # tanh(0) -> 0.5, re-mask
    inter = jnp.sum(jnp.sum(sig * tg, axis=2, keepdims=True), axis=1, keepdims=True)
    s_in = jnp.sum(jnp.sum(sig, axis=2, keepdims=True), axis=1, keepdims=True)
    s_tg = jnp.sum(jnp.sum(tg, axis=2, keepdims=True), axis=1, keepdims=True)

    @pl.when(t_idx == 0)
    def _():
        ce_ref[...] = jnp.zeros_like(ce_ref)
        it_ref[...] = jnp.zeros_like(it_ref)
        si_ref[...] = jnp.zeros_like(si_ref)
        st_ref[...] = jnp.zeros_like(st_ref)

    # Output blocks are (1, 1, bn, 1) and resident across the "arbitrary" t axis.
    ce_ref[0, 0] += ce_part[:, 0, :]
    it_ref[0, 0] += inter[:, 0, :]
    si_ref[0, 0] += s_in[:, 0, :]
    st_ref[0, 0] += s_tg[:, 0, :]


def bce_dice_loss(input_nchw, target_nchw, *, hw_tile=None, sample_block=None):
    """JAX/Pallas equivalent of BCEDiceLoss.forward(input, target).

    input_nchw:  (N, C, H, W) logits (f32 or bf16)
    target_nchw: (N, C, H, W) probability targets (same shape as input)
    Returns a scalar float32 loss.
    """
    N, C, H, W = input_nchw.shape
    HW = H * W
    # Free metadata reshape; keep native dtype so HBM traffic is not doubled.
    x = input_nchw.reshape(N, C, HW)
    t = target_nchw.reshape(N, C, HW)
    itemsize = max(jnp.dtype(x.dtype).itemsize, jnp.dtype(t.dtype).itemsize)

    TARGET_IN_TILE = 4 << 20      # ~4 MiB per input per pipeline buffer (review)
    HARD_VMEM_BUDGET = 46 << 20   # keep total well under v7x's 64 MiB physical VMEM
    F32_TEMPS = 6                 # tile-sized f32 intermediates (upcasts, z, exp, logp, sig, ...)

    def vmem_estimate(bn_, cols_):
        # 2 inputs x 2 pipeline buffers (native dtype) + ~6 full-tile f32 temporaries.
        return bn_ * C * cols_ * (4 * itemsize + F32_TEMPS * 4)

    per_sample_bytes = C * HW * itemsize
    small_images = (per_sample_bytes <= TARGET_IN_TILE
                    and vmem_estimate(1, HW) <= HARD_VMEM_BUDGET)

    # --- samples per grid step (pack small images until the block is ~TARGET) ---------
    if sample_block is not None:
        bn = int(sample_block)
        assert N % bn == 0, "sample_block must divide N"
    elif small_images and hw_tile is None:
        bn = 1
        for d in range(N, 0, -1):   # largest divisor of N that fits the tile budget
            if (N % d == 0 and d * per_sample_bytes <= TARGET_IN_TILE
                    and vmem_estimate(d, HW) <= HARD_VMEM_BUDGET):
                bn = d
                break
    else:
        bn = 1

    # --- spatial tile ------------------------------------------------------------------
    if hw_tile is not None:
        hw_tile = min(int(hw_tile), HW)
        assert hw_tile == HW or hw_tile % 128 == 0, \
            "hw_tile must be the full HW or a multiple of 128"
    elif small_images:
        hw_tile = HW
    else:
        per_col = bn * C * (4 * itemsize + F32_TEMPS * 4)
        cols_hard = max(128, (HARD_VMEM_BUDGET // per_col) // 128 * 128)
        cols_target = max(128, (TARGET_IN_TILE // (bn * C * itemsize)) // 128 * 128)
        # >=512-lane floor keeps each of the C strided DMA rows >=2 KiB (large-C models).
        cols = min(max(cols_target, 512), cols_hard)
        if cols >= HW:
            hw_tile = HW
        else:
            # Prefer an exact 128-multiple divisor of HW: no remainder mask on any tile.
            hw_tile = cols
            d = cols
            lo = max(128, cols // 2)
            while d >= lo:
                if HW % d == 0:
                    hw_tile = d
                    break
                d -= 128

    n_hw_tiles = pl.cdiv(HW, hw_tile)
    NB = N // bn

    # --- 2-way parallel split of the HW reduction when only one batch block -----------
    # (keeps both v7x TensorCores busy for batch-1 / fully-packed workloads; no effect on
    #  single-TC v5e/v6e).
    P = 2 if (NB == 1 and n_hw_tiles >= 2 and n_hw_tiles % 2 == 0) else 1
    T = n_hw_tiles // P

    vmem_limit = int(min(max(vmem_estimate(bn, hw_tile) + (4 << 20), 32 << 20), 48 << 20))

    kernel = functools.partial(
        _bce_dice_kernel,
        inv_ce_den=1.0 / float(N * HW),   # F.cross_entropy mean over N*H*W positions
        hw=HW,
        hw_tile=hw_tile,
    )

    elems = N * C * HW
    cost = pl.CostEstimate(
        flops=int(12 * elems),
        transcendentals=int(2 * elems + N * HW),          # exp + tanh per elem, log per column
        bytes_accessed=int(2 * elems * itemsize + 16 * N * P),
    )

    in_spec = pl.BlockSpec((bn, C, hw_tile), lambda nb, p, tt: (nb, 0, p * T + tt))
    out_spec = pl.BlockSpec((1, 1, bn, 1), lambda nb, p, tt: (nb, p, 0, 0))
    part_shape = jax.ShapeDtypeStruct((NB, P, bn, 1), jnp.float32)

    ce_p, it_p, si_p, st_p = pl.pallas_call(
        kernel,
        out_shape=(part_shape, part_shape, part_shape, part_shape),
        grid_spec=pltpu.PrefetchScalarGridSpec(
            num_scalar_prefetch=0,
            grid=(NB, P, T),
            in_specs=[in_spec, in_spec],
            out_specs=[out_spec, out_spec, out_spec, out_spec],
        ),
        compiler_params=pltpu.CompilerParams(
            dimension_semantics=("parallel", "parallel", "arbitrary"),
            vmem_limit_bytes=vmem_limit,
        ),
        cost_estimate=cost,
    )(x, t)

    # Tiny wrapper epilogue: dice is nonlinear, so the raw partial sums are combined here.
    smooth = 1e-5
    inter = jnp.sum(it_p, axis=(1, 3)).reshape(N)
    s_in = jnp.sum(si_p, axis=(1, 3)).reshape(N)
    s_tg = jnp.sum(st_p, axis=(1, 3)).reshape(N)
    dice = (2.0 * inter + smooth) / (s_in + s_tg + smooth)
    return 0.5 * jnp.sum(ce_p) + (1.0 - jnp.sum(dice) / N)


def _reference_loss(x, t):
    """Pure-JAX reference mirroring the PyTorch module exactly."""
    N = x.shape[0]
    logp = jax.nn.log_softmax(x, axis=1)
    ce = -jnp.mean(jnp.sum(t * logp, axis=1))
    sig = jax.nn.sigmoid(x)
    inp = sig.reshape(N, -1)
    tg = t.reshape(N, -1)
    smooth = 1e-5
    inter = jnp.sum(inp * tg, axis=1)
    dice = (2.0 * inter + smooth) / (jnp.sum(inp, axis=1) + jnp.sum(tg, axis=1) + smooth)
    dice = 1.0 - jnp.sum(dice) / N
    return 0.5 * ce + dice


if __name__ == "__main__":
    # BCEDiceLoss has no learnable parameters; nothing to initialize.
    key = jax.random.PRNGKey(0)
    ks = jax.random.split(key, 6)

    # Case 1: small canonical shape — samples packed into one block, single HW tile.
    N, C, H, W = 2, 4, 16, 16
    logits = jax.random.normal(ks[0], (N, C, H, W), dtype=jnp.float32)
    target = jax.random.uniform(ks[1], (N, C, H, W), dtype=jnp.float32)
    loss = jax.block_until_ready(bce_dice_loss(logits, target))
    ref = jax.block_until_ready(_reference_loss(logits, target))
    assert jnp.isfinite(loss), "non-finite loss"
    assert jnp.allclose(loss, ref, rtol=1e-5, atol=1e-5), (loss, ref)

    # Case 2: tiled-HW path with a masked remainder tile and odd C.
    N2, C2, H2, W2 = 2, 3, 40, 50        # HW = 2000; hw_tile=256 -> 8 tiles, last masked
    logits2 = jax.random.normal(ks[2], (N2, C2, H2, W2), dtype=jnp.float32)
    target2 = jax.random.uniform(ks[3], (N2, C2, H2, W2), dtype=jnp.float32)
    loss2 = jax.block_until_ready(
        bce_dice_loss(logits2, target2, hw_tile=256, sample_block=1))
    ref2 = jax.block_until_ready(_reference_loss(logits2, target2))
    assert jnp.isfinite(loss2), "non-finite loss (tiled path)"
    assert jnp.allclose(loss2, ref2, rtol=1e-5, atol=1e-5), (loss2, ref2)

    # Case 3: batch-1 input -> 2-way parallel split of the HW reduction (v7x megacore).
    N3, C3, H3, W3 = 1, 4, 32, 32        # HW = 1024; hw_tile=128 -> 8 tiles, P=2, T=4
    logits3 = jax.random.normal(ks[4], (N3, C3, H3, W3), dtype=jnp.float32)
    target3 = jax.random.uniform(ks[5], (N3, C3, H3, W3), dtype=jnp.float32)
    loss3 = jax.block_until_ready(
        bce_dice_loss(logits3, target3, hw_tile=128, sample_block=1))
    ref3 = jax.block_until_ready(_reference_loss(logits3, target3))
    assert jnp.isfinite(loss3), "non-finite loss (split path)"
    assert jnp.allclose(loss3, ref3, rtol=1e-5, atol=1e-5), (loss3, ref3)

    print("KERNEL_OK")
</pallas_src>

<mosaic_0001>
module attributes {stable_mosaic.version = 11 : i64} {
  func.func @_bce_dice_kernel(%arg0: i32, %arg1: i32, %arg2: i32, %arg3: memref<2x4x256xf32, #tpu.memory_space<vmem>>, %arg4: memref<2x4x256xf32, #tpu.memory_space<vmem>>, %arg5: memref<1x1x2x1xf32, #tpu.memory_space<vmem>>, %arg6: memref<1x1x2x1xf32, #tpu.memory_space<vmem>>, %arg7: memref<1x1x2x1xf32, #tpu.memory_space<vmem>>, %arg8: memref<1x1x2x1xf32, #tpu.memory_space<vmem>>) attributes {dimension_semantics = [#tpu.dimension_semantics<parallel>, #tpu.dimension_semantics<parallel>, #tpu.dimension_semantics<arbitrary>], iteration_bounds = array<i64: 1, 1, 1>, scalar_prefetch = 0 : i64, scratch_operands = 0 : i64, tpu.core_type = #tpu.core_type<tc>, window_params = [{transform_indices = @transform_0, window_bounds = array<i64: 2, 4, 256>}, {transform_indices = @transform_1, window_bounds = array<i64: 2, 4, 256>}, {transform_indices = @transform_2, window_bounds = array<i64: 1, 1, 2, 1>}, {transform_indices = @transform_3, window_bounds = array<i64: 1, 1, 2, 1>}, {transform_indices = @transform_4, window_bounds = array<i64: 1, 1, 2, 1>}, {transform_indices = @transform_5, window_bounds = array<i64: 1, 1, 2, 1>}]} {
    %c0 = arith.constant 0 : index
    %c0_0 = arith.constant 0 : index
    %c0_1 = arith.constant 0 : index
    %0 = vector.load %arg3[%c0, %c0_0, %c0_1] : memref<2x4x256xf32, #tpu.memory_space<vmem>>, vector<2x4x256xf32>
    %c0_2 = arith.constant 0 : index
    %c0_3 = arith.constant 0 : index
    %c0_4 = arith.constant 0 : index
    %1 = vector.load %arg4[%c0_2, %c0_3, %c0_4] : memref<2x4x256xf32, #tpu.memory_space<vmem>>, vector<2x4x256xf32>
    %cst = arith.constant dense<0xFF800000> : vector<2x256xf32>
    %2 = vector.multi_reduction <maximumf>, %0, %cst [1] : vector<2x4x256xf32> to vector<2x256xf32>
    %3 = vector.shape_cast %2 : vector<2x256xf32> to vector<2x1x256xf32>
    %4 = vector.broadcast %3 : vector<2x1x256xf32> to vector<2x4x256xf32>
    %5 = arith.subf %0, %4 : vector<2x4x256xf32>
    %6 = math.exp %5 : vector<2x4x256xf32>
    %cst_5 = arith.constant dense<0.000000e+00> : vector<2x256xf32>
    %7 = vector.multi_reduction <add>, %6, %cst_5 [1] : vector<2x4x256xf32> to vector<2x256xf32>
    %8 = vector.shape_cast %7 : vector<2x256xf32> to vector<2x1x256xf32>
    %9 = math.log %8 : vector<2x1x256xf32>
    %10 = vector.broadcast %9 : vector<2x1x256xf32> to vector<2x4x256xf32>
    %11 = arith.subf %5, %10 : vector<2x4x256xf32>
    %12 = arith.mulf %1, %11 : vector<2x4x256xf32>
    %cst_6 = arith.constant dense<0.000000e+00> : vector<2x4xf32>
    %13 = vector.multi_reduction <add>, %12, %cst_6 [2] : vector<2x4x256xf32> to vector<2x4xf32>
    %14 = vector.shape_cast %13 : vector<2x4xf32> to vector<2x4x1xf32>
    %cst_7 = arith.constant dense<0.000000e+00> : vector<2x1xf32>
    %15 = vector.multi_reduction <add>, %14, %cst_7 [1] : vector<2x4x1xf32> to vector<2x1xf32>
    %16 = vector.shape_cast %15 : vector<2x1xf32> to vector<2x1x1xf32>
    %cst_8 = arith.constant 0.000000e+00 : f32
    %17 = vector.broadcast %cst_8 : f32 to vector<2x1x1xf32>
    %18 = arith.subf %17, %16 : vector<2x1x1xf32>
    %cst_9 = arith.constant 0.001953125 : f32
    %19 = vector.broadcast %cst_9 : f32 to vector<2x1x1xf32>
    %20 = arith.mulf %18, %19 : vector<2x1x1xf32>
    %cst_10 = arith.constant 5.000000e-01 : f32
    %21 = vector.broadcast %cst_10 : f32 to vector<2x4x256xf32>
    %22 = arith.mulf %21, %0 : vector<2x4x256xf32>
    %23 = math.tanh %22 : vector<2x4x256xf32>
    %cst_11 = arith.constant 5.000000e-01 : f32
    %24 = vector.broadcast %cst_11 : f32 to vector<2x4x256xf32>
    %25 = arith.mulf %24, %23 : vector<2x4x256xf32>
    %cst_12 = arith.constant 5.000000e-01 : f32
    %26 = vector.broadcast %cst_12 : f32 to vector<2x4x256xf32>
    %27 = arith.addf %25, %26 : vector<2x4x256xf32>
    %28 = arith.mulf %27, %1 : vector<2x4x256xf32>
    %cst_13 = arith.constant dense<0.000000e+00> : vector<2x4xf32>
    %29 = vector.multi_reduction <add>, %28, %cst_13 [2] : vector<2x4x256xf32> to vector<2x4xf32>
    %30 = vector.shape_cast %29 : vector<2x4xf32> to vector<2x4x1xf32>
    %cst_14 = arith.constant dense<0.000000e+00> : vector<2x1xf32>
    %31 = vector.multi_reduction <add>, %30, %cst_14 [1] : vector<2x4x1xf32> to vector<2x1xf32>
    %32 = vector.shape_cast %31 : vector<2x1xf32> to vector<2x1x1xf32>
    %cst_15 = arith.constant dense<0.000000e+00> : vector<2x4xf32>
    %33 = vector.multi_reduction <add>, %27, %cst_15 [2] : vector<2x4x256xf32> to vector<2x4xf32>
    %34 = vector.shape_cast %33 : vector<2x4xf32> to vector<2x4x1xf32>
    %cst_16 = arith.constant dense<0.000000e+00> : vector<2x1xf32>
    %35 = vector.multi_reduction <add>, %34, %cst_16 [1] : vector<2x4x1xf32> to vector<2x1xf32>
    %36 = vector.shape_cast %35 : vector<2x1xf32> to vector<2x1x1xf32>
    %cst_17 = arith.constant dense<0.000000e+00> : vector<2x4xf32>
    %37 = vector.multi_reduction <add>, %1, %cst_17 [2] : vector<2x4x256xf32> to vector<2x4xf32>
    %38 = vector.shape_cast %37 : vector<2x4xf32> to vector<2x4x1xf32>
    %cst_18 = arith.constant dense<0.000000e+00> : vector<2x1xf32>
    %39 = vector.multi_reduction <add>, %38, %cst_18 [1] : vector<2x4x1xf32> to vector<2x1xf32>
    %40 = vector.shape_cast %39 : vector<2x1xf32> to vector<2x1x1xf32>
    %c0_i32 = arith.constant 0 : i32
    %41 = arith.cmpi eq, %arg2, %c0_i32 : i32
    %42 = arith.extui %41 : i1 to i32
    %c0_i32_19 = arith.constant 0 : i32
    %43 = arith.cmpi ne, %42, %c0_i32_19 : i32
    scf.if %43 {
      %cst_52 = arith.constant 0.000000e+00 : f32
      %72 = vector.broadcast %cst_52 : f32 to vector<1x1x2x1xf32>
      %c0_53 = arith.constant 0 : index
      %c0_54 = arith.constant 0 : index
      %c0_55 = arith.constant 0 : index
      %c0_56 = arith.constant 0 : index
      %73 = vector.load %arg5[%c0_53, %c0_54, %c0_55, %c0_56] : memref<1x1x2x1xf32, #tpu.memory_space<vmem>>, vector<1x1x2x1xf32>
      tpu.vector_store %arg5[%c0_53, %c0_54, %c0_55, %c0_56], %72 {strides = array<i32>} : memref<1x1x2x1xf32, #tpu.memory_space<vmem>>, vector<1x1x2x1xf32>,
      %cst_57 = arith.constant 0.000000e+00 : f32
      %74 = vector.broadcast %cst_57 : f32 to vector<1x1x2x1xf32>
      %c0_58 = arith.constant 0 : index
      %c0_59 = arith.constant 0 : index
      %c0_60 = arith.constant 0 : index
      %c0_61 = arith.constant 0 : index
      %75 = vector.load %arg6[%c0_58, %c0_59, %c0_60, %c0_61] : memref<1x1x2x1xf32, #tpu.memory_space<vmem>>, vector<1x1x2x1xf32>
      tpu.vector_store %arg6[%c0_58, %c0_59, %c0_60, %c0_61], %74 {strides = array<i32>} : memref<1x1x2x1xf32, #tpu.memory_space<vmem>>, vector<1x1x2x1xf32>,
      %cst_62 = arith.constant 0.000000e+00 : f32
      %76 = vector.broadcast %cst_62 : f32 to vector<1x1x2x1xf32>
      %c0_63 = arith.constant 0 : index
      %c0_64 = arith.constant 0 : index
      %c0_65 = arith.constant 0 : index
      %c0_66 = arith.constant 0 : index
      %77 = vector.load %arg7[%c0_63, %c0_64, %c0_65, %c0_66] : memref<1x1x2x1xf32, #tpu.memory_space<vmem>>, vector<1x1x2x1xf32>
      tpu.vector_store %arg7[%c0_63, %c0_64, %c0_65, %c0_66], %76 {strides = array<i32>} : memref<1x1x2x1xf32, #tpu.memory_space<vmem>>, vector<1x1x2x1xf32>,
      %cst_67 = arith.constant 0.000000e+00 : f32
      %78 = vector.broadcast %cst_67 : f32 to vector<1x1x2x1xf32>
      %c0_68 = arith.constant 0 : index
      %c0_69 = arith.constant 0 : index
      %c0_70 = arith.constant 0 : index
      %c0_71 = arith.constant 0 : index
      %79 = vector.load %arg8[%c0_68, %c0_69, %c0_70, %c0_71] : memref<1x1x2x1xf32, #tpu.memory_space<vmem>>, vector<1x1x2x1xf32>
      tpu.vector_store %arg8[%c0_68, %c0_69, %c0_70, %c0_71], %78 {strides = array<i32>} : memref<1x1x2x1xf32, #tpu.memory_space<vmem>>, vector<1x1x2x1xf32>,
    } else {
    }
    %c0_20 = arith.constant 0 : index
    %c0_21 = arith.constant 0 : index
    %c0_22 = arith.constant 0 : index
    %c0_23 = arith.constant 0 : index
    %44 = vector.load %arg5[%c0_20, %c0_21, %c0_22, %c0_23] : memref<1x1x2x1xf32, #tpu.memory_space<vmem>>, vector<1x1x2x1xf32>
    %45 = vector.shape_cast %44 : vector<1x1x2x1xf32> to vector<2x1xf32>
    %46 = vector.shape_cast %20 : vector<2x1x1xf32> to vector<2x1xf32>
    %47 = arith.addf %45, %46 : vector<2x1xf32>
    %c0_24 = arith.constant 0 : index
    %c0_25 = arith.constant 0 : index
    %c0_26 = arith.constant 0 : index
    %c0_27 = arith.constant 0 : index
    %48 = vector.load %arg5[%c0_24, %c0_25, %c0_26, %c0_27] : memref<1x1x2x1xf32, #tpu.memory_space<vmem>>, vector<1x1x2x1xf32>
    %49 = vector.shape_cast %48 : vector<1x1x2x1xf32> to vector<2x1xf32>
    %50 = vector.shape_cast %47 : vector<2x1xf32> to vector<1x1x2x1xf32>
    tpu.vector_store %arg5[%c0_24, %c0_25, %c0_26, %c0_27], %50 {strides = array<i32>} : memref<1x1x2x1xf32, #tpu.memory_space<vmem>>, vector<1x1x2x1xf32>,
    %c0_28 = arith.constant 0 : index
    %c0_29 = arith.constant 0 : index
    %c0_30 = arith.constant 0 : index
    %c0_31 = arith.constant 0 : index
    %51 = vector.load %arg6[%c0_28, %c0_29, %c0_30, %c0_31] : memref<1x1x2x1xf32, #tpu.memory_space<vmem>>, vector<1x1x2x1xf32>
    %52 = vector.shape_cast %51 : vector<1x1x2x1xf32> to vector<2x1xf32>
    %53 = vector.shape_cast %32 : vector<2x1x1xf32> to vector<2x1xf32>
    %54 = arith.addf %52, %53 : vector<2x1xf32>
    %c0_32 = arith.constant 0 : index
    %c0_33 = arith.constant 0 : index
    %c0_34 = arith.constant 0 : index
    %c0_35 = arith.constant 0 : index
    %55 = vector.load %arg6[%c0_32, %c0_33, %c0_34, %c0_35] : memref<1x1x2x1xf32, #tpu.memory_space<vmem>>, vector<1x1x2x1xf32>
    %56 = vector.shape_cast %55 : vector<1x1x2x1xf32> to vector<2x1xf32>
    %57 = vector.shape_cast %54 : vector<2x1xf32> to vector<1x1x2x1xf32>
    tpu.vector_store %arg6[%c0_32, %c0_33, %c0_34, %c0_35], %57 {strides = array<i32>} : memref<1x1x2x1xf32, #tpu.memory_space<vmem>>, vector<1x1x2x1xf32>,
    %c0_36 = arith.constant 0 : index
    %c0_37 = arith.constant 0 : index
    %c0_38 = arith.constant 0 : index
    %c0_39 = arith.constant 0 : index
    %58 = vector.load %arg7[%c0_36, %c0_37, %c0_38, %c0_39] : memref<1x1x2x1xf32, #tpu.memory_space<vmem>>, vector<1x1x2x1xf32>
    %59 = vector.shape_cast %58 : vector<1x1x2x1xf32> to vector<2x1xf32>
    %60 = vector.shape_cast %36 : vector<2x1x1xf32> to vector<2x1xf32>
    %61 = arith.addf %59, %60 : vector<2x1xf32>
    %c0_40 = arith.constant 0 : index
    %c0_41 = arith.constant 0 : index
    %c0_42 = arith.constant 0 : index
    %c0_43 = arith.constant 0 : index
    %62 = vector.load %arg7[%c0_40, %c0_41, %c0_42, %c0_43] : memref<1x1x2x1xf32, #tpu.memory_space<vmem>>, vector<1x1x2x1xf32>
    %63 = vector.shape_cast %62 : vector<1x1x2x1xf32> to vector<2x1xf32>
    %64 = vector.shape_cast %61 : vector<2x1xf32> to vector<1x1x2x1xf32>
    tpu.vector_store %arg7[%c0_40, %c0_41, %c0_42, %c0_43], %64 {strides = array<i32>} : memref<1x1x2x1xf32, #tpu.memory_space<vmem>>, vector<1x1x2x1xf32>,
    %c0_44 = arith.constant 0 : index
    %c0_45 = arith.constant 0 : index
    %c0_46 = arith.constant 0 : index
    %c0_47 = arith.constant 0 : index
    %65 = vector.load %arg8[%c0_44, %c0_45, %c0_46, %c0_47] : memref<1x1x2x1xf32, #tpu.memory_space<vmem>>, vector<1x1x2x1xf32>
    %66 = vector.shape_cast %65 : vector<1x1x2x1xf32> to vector<2x1xf32>
    %67 = vector.shape_cast %40 : vector<2x1x1xf32> to vector<2x1xf32>
    %68 = arith.addf %66, %67 : vector<2x1xf32>
    %c0_48 = arith.constant 0 : index
    %c0_49 = arith.constant 0 : index
    %c0_50 = arith.constant 0 : index
    %c0_51 = arith.constant 0 : index
    %69 = vector.load %arg8[%c0_48, %c0_49, %c0_50, %c0_51] : memref<1x1x2x1xf32, #tpu.memory_space<vmem>>, vector<1x1x2x1xf32>
    %70 = vector.shape_cast %69 : vector<1x1x2x1xf32> to vector<2x1xf32>
    %71 = vector.shape_cast %68 : vector<2x1xf32> to vector<1x1x2x1xf32>
    tpu.vector_store %arg8[%c0_48, %c0_49, %c0_50, %c0_51], %71 {strides = array<i32>} : memref<1x1x2x1xf32, #tpu.memory_space<vmem>>, vector<1x1x2x1xf32>,
    return
  }
  func.func @transform_0(%arg0: i32, %arg1: i32, %arg2: i32) -> (i32, i32, i32) {
    %c1_i32 = arith.constant 1 : i32
    %0 = arith.muli %arg1, %c1_i32 : i32
    %1 = arith.addi %0, %arg2 : i32
    %c0_i32 = arith.constant 0 : i32
    %c0_i32_0 = arith.constant 0 : i32
    return %arg0, %c0_i32, %1 : i32, i32, i32
  }
  func.func @transform_1(%arg0: i32, %arg1: i32, %arg2: i32) -> (i32, i32, i32) {
    %c1_i32 = arith.constant 1 : i32
    %0 = arith.muli %arg1, %c1_i32 : i32
    %1 = arith.addi %0, %arg2 : i32
    %c0_i32 = arith.constant 0 : i32
    %c0_i32_0 = arith.constant 0 : i32
    return %arg0, %c0_i32, %1 : i32, i32, i32
  }
  func.func @transform_2(%arg0: i32, %arg1: i32, %arg2: i32) -> (i32, i32, i32, i32) {
    %c0_i32 = arith.constant 0 : i32
    %c0_i32_0 = arith.constant 0 : i32
    %c0_i32_1 = arith.constant 0 : i32
    return %arg0, %arg1, %c0_i32, %c0_i32_0 : i32, i32, i32, i32
  }
  func.func @transform_3(%arg0: i32, %arg1: i32, %arg2: i32) -> (i32, i32, i32, i32) {
    %c0_i32 = arith.constant 0 : i32
    %c0_i32_0 = arith.constant 0 : i32
    %c0_i32_1 = arith.constant 0 : i32
    return %arg0, %arg1, %c0_i32, %c0_i32_0 : i32, i32, i32, i32
  }
  func.func @transform_4(%arg0: i32, %arg1: i32, %arg2: i32) -> (i32, i32, i32, i32) {
    %c0_i32 = arith.constant 0 : i32
    %c0_i32_0 = arith.constant 0 : i32
    %c0_i32_1 = arith.constant 0 : i32
    return %arg0, %arg1, %c0_i32, %c0_i32_0 : i32, i32, i32, i32
  }
  func.func @transform_5(%arg0: i32, %arg1: i32, %arg2: i32) -> (i32, i32, i32, i32) {
    %c0_i32 = arith.constant 0 : i32
    %c0_i32_0 = arith.constant 0 : i32
    %c0_i32_1 = arith.constant 0 : i32
    return %arg0, %arg1, %c0_i32, %c0_i32_0 : i32, i32, i32, i32
  }
}

</mosaic_0001>

<llo_original>
// kernel: tpu_custom_call.1
$region0: #{tpu_custom_call.1}
  #allocation0 [shape = 'u32[]', space=smem, size = 0x4, offset = 0x4, fixed_abs, tag = 'smem constant byte address 0x4 - core index']
  #allocation1 [shape = 'u32[72,128]{1,0:T(1,128)}', space=vmem, size = 0x9000, scoped, tag = 'internal scratch']
  %s0 = inlined_call_operand.hbm [shape: f32[2,4,256], index: 0, kind: input, shape index: {}]
  %s1 = inlined_call_operand.hbm [shape: f32[2,4,256], index: 1, kind: input, shape index: {}]
  %s2 = inlined_call_operand.vmem [shape: f32[1,1,2,1], index: 2, kind: output, shape index: {0}]
  %s3 = inlined_call_operand.vmem [shape: f32[1,1,2,1], index: 3, kind: output, shape index: {1}]
  %s4 = inlined_call_operand.vmem [shape: f32[1,1,2,1], index: 4, kind: output, shape index: {2}]
  %s5 = inlined_call_operand.vmem [shape: f32[1,1,2,1], index: 5, kind: output, shape index: {3}]
  %6 = xla_tuple %s2, %s3, %s4, %s5
  %s7 = sld [smem:[#allocation0]]
  $region54: #{tpu_custom_call.1} parent=0
    _
  %s9 = ssub.s32 1, %s7
  %s10 = scalar_select 0, %s9, %s7
  $region1: #{tpu_custom_call.1} parent=0
    #allocation2 [shape = 'u8[8192]{0}', space=vmem, size = 0x2000, scoped, tag = 'input window, operand 0, single buffered']
    #allocation3 [shape = 's32[1]{0}', space=sflag, size = 0x4, scoped, tag = 'scoped memory for tpu_custom_call.1']
    #allocation4 [shape = 'u8[8192]{0}', space=vmem, size = 0x2000, scoped, tag = 'input window, operand 1, single buffered']
    #allocation5 [shape = 's32[1]{0}', space=sflag, size = 0x4, scoped, tag = 'scoped memory for tpu_custom_call.1']
    %11 = vsyncpa [#allocation3], 0
    %12 = vsyncpa [#allocation5], 0
    // Predicated region
    $region2: #{tpu_custom_call.1} parent=1 // pred_check
      _
    $region3: #{tpu_custom_call.1} parent=1 // pred_check_branch
      %14 = sbr.rel (0) target = $region5
    $region4: #{tpu_custom_call.1} parent=1 // pred_region
      %s15 = sadd.s32 0, 0
      %s16 = smul.u32 2, %s15
      %18 = vsyncadd [#allocation3], 0
      %s19 = smul.addr %s16, 4
      %s20 = scalar_lea.hbm %s0, %s19
      %s21 = sshll.u32 %s20, 4
      %s22 = int_to_ptr.hbm [resolvable:$true] %s21
      %s23 = sshll.u32 [#allocation2], 4
      %s24 = int_to_ptr.vmem [resolvable:$true] %s23
      %29 = dma.hbm_to_vmem [thread:$0]  %s22, 256, %s24, [#allocation3], 128, 128, 8
    $region5: #{tpu_custom_call.1} parent=1 // pred_fallthru
      _
    // Predicated region
    $region6: #{tpu_custom_call.1} parent=1 // pred_check
      _
    $region7: #{tpu_custom_call.1} parent=1 // pred_check_branch
      %31 = sbr.rel (0) target = $region9
    $region8: #{tpu_custom_call.1} parent=1 // pred_region
      %s32 = sadd.s32 0, 0
      %s33 = smul.u32 2, %s32
      %35 = vsyncadd [#allocation5], 0
      %s36 = smul.addr %s33, 4
      %s37 = scalar_lea.hbm %s1, %s36
      %s38 = sshll.u32 %s37, 4
      %s39 = int_to_ptr.hbm [resolvable:$true] %s38
      %s40 = sshll.u32 [#allocation4], 4
      %s41 = int_to_ptr.vmem [resolvable:$true] %s40
      %46 = dma.hbm_to_vmem [thread:$0]  %s39, 256, %s41, [#allocation5], 128, 128, 8
    $region9: #{tpu_custom_call.1} parent=1 // pred_fallthru
      _
    // Predicated region
    $region10: #{tpu_custom_call.1} parent=1 // pred_check
      _
    $region11: #{tpu_custom_call.1} parent=1 // pred_check_branch
      %48 = sbr.rel (0) target = $region13
    $region12: #{tpu_custom_call.1} parent=1 // pred_region
      %50 = dma.done [#allocation3], 256
    $region13: #{tpu_custom_call.1} parent=1 // pred_fallthru
      _
    // Predicated region
    $region14: #{tpu_custom_call.1} parent=1 // pred_check
      _
    $region15: #{tpu_custom_call.1} parent=1 // pred_check_branch
      %52 = sbr.rel (0) target = $region17
    $region16: #{tpu_custom_call.1} parent=1 // pred_region
      %54 = dma.done [#allocation5], 256
    $region17: #{tpu_custom_call.1} parent=1 // pred_fallthru
      _
    %s55 = sadd.s32 0, 0
    %s56 = smul.u32 2, %s55
    %s57 = sadd.s32 0, 0
    %s58 = smul.u32 2, %s57
    %v59 = vld [vmem:[#allocation2] sm:$0xff]
    %v60 = vld [vmem:[#allocation2 + $0x8] sm:$0xff]
    %v61 = vld [vmem:[#allocation4] sm:$0xff]
    %v62 = vld [vmem:[#allocation4 + $0x8] sm:$0xff]
    %65 = vst [vmem:[#allocation1] ss:$2 sm:$0xff] %v59
    %v66 = vld.sshfl [vmem:[#allocation1] sm:$0xff pattern:$0x75316420]
    %v67 = vld.sshfl [vmem:[#allocation1 + $0x8] sm:$0xff pattern:$0x75316420]
    %s68 = scalar_lea.vmem [#allocation1], 16
    %69 = vst [vmem:[%s68] ss:$2 sm:$0xff] %v60
    %v70 = vld.sshfl [vmem:[#allocation1 + $0x10] sm:$0xff pattern:$0x75316420]
    %v71 = vld.sshfl [vmem:[#allocation1 + $0x18] sm:$0xff pattern:$0x75316420]
    %vm76 = vcmask 1043456
    %v77 = vsel %vm76, %v66, -inf
    %v78 = vrot.slane %v77, 4
    %v79 = vmax.f32 %v77, %v78
    %v80 = vrot.slane %v79, 2
    %v81 = vmax.f32 %v79, %v80
    %v82 = vrot.slane %v81, 1
    %v83 = vmax.f32 %v81, %v82
    %v84 = vsel %vm76, %v67, -inf
    %v85 = vrot.slane %v84, 4
    %v86 = vmax.f32 %v84, %v85
    %v87 = vrot.slane %v86, 2
    %v88 = vmax.f32 %v86, %v87
    %v89 = vrot.slane %v88, 1
    %v90 = vmax.f32 %v88, %v89
    %v91 = vsel %vm76, %v70, -inf
    %v92 = vrot.slane %v91, 4
    %v93 = vmax.f32 %v91, %v92
    %v94 = vrot.slane %v93, 2
    %v95 = vmax.f32 %v93, %v94
    %v96 = vrot.slane %v95, 1
    %v97 = vmax.f32 %v95, %v96
    %v98 = vsel %vm76, %v71, -inf
    %v99 = vrot.slane %v98, 4
    %v100 = vmax.f32 %v98, %v99
    %v101 = vrot.slane %v100, 2
    %v102 = vmax.f32 %v100, %v101
    %v103 = vrot.slane %v102, 1
    %v104 = vmax.f32 %v102, %v103
    %v109 = vrot.slane %v90, 4
    %v110 = vrot.slane %v104, 4
    %v111 = vsel %vm76, %v83, %v109
    %v112 = vsel %vm76, %v97, %v110
    %v115 = vsub.f32 %v59, %v111
    %v116 = vsub.f32 %v60, %v112
    %v117 = vmul.f32 %v115, 1.442695
    %v118 = vpow.pop %v117
    %v119 = vmul.f32 %v116, 1.442695
    %v120 = vpow.pop %v119
    %123 = vst [vmem:[#allocation1] ss:$2 sm:$0xff] %v118
    %v124 = vld.sshfl [vmem:[#allocation1] sm:$0xff pattern:$0x75316420]
    %v125 = vld.sshfl [vmem:[#allocation1 + $0x8] sm:$0xff pattern:$0x75316420]
    %s126 = scalar_lea.vmem [#allocation1], 16
    %127 = vst [vmem:[%s126] ss:$2 sm:$0xff] %v120
    %v128 = vld.sshfl [vmem:[#allocation1 + $0x10] sm:$0xff pattern:$0x75316420]
    %v129 = vld.sshfl [vmem:[#allocation1 + $0x18] sm:$0xff pattern:$0x75316420]
    %v134 = vsel %vm76, %v124, 0.0
    %v135 = vrot.slane %v134, 4
    %v136 = vadd.f32 %v134, %v135
    %v137 = vrot.slane %v136, 2
    %v138 = vadd.f32 %v136, %v137
    %v139 = vrot.slane %v138, 1
    %v140 = vadd.f32 %v138, %v139
    %v141 = vsel %vm76, %v125, 0.0
    %v142 = vrot.slane %v141, 4
    %v143 = vadd.f32 %v141, %v142
    %v144 = vrot.slane %v143, 2
    %v145 = vadd.f32 %v143, %v144
    %v146 = vrot.slane %v145, 1
    %v147 = vadd.f32 %v145, %v146
    %v148 = vsel %vm76, %v128, 0.0
    %v149 = vrot.slane %v148, 4
    %v150 = vadd.f32 %v148, %v149
    %v151 = vrot.slane %v150, 2
    %v152 = vadd.f32 %v150, %v151
    %v153 = vrot.slane %v152, 1
    %v154 = vadd.f32 %v152, %v153
    %v155 = vsel %vm76, %v129, 0.0
    %v156 = vrot.slane %v155, 4
    %v157 = vadd.f32 %v155, %v156
    %v158 = vrot.slane %v157, 2
    %v159 = vadd.f32 %v157, %v158
    %v160 = vrot.slane %v159, 1
    %v161 = vadd.f32 %v159, %v160
    %v162 = vlog2.pop %v140
    %v163 = vmul.f32 %v162, 0.6931472
    %v164 = vlog2.pop %v147
    %v165 = vmul.f32 %v164, 0.6931472
    %v166 = vlog2.pop %v154
    %v167 = vmul.f32 %v166, 0.6931472
    %v168 = vlog2.pop %v161
    %v169 = vmul.f32 %v168, 0.6931472
    %v174 = vrot.slane %v165, 4
    %v175 = vrot.slane %v169, 4
    %v176 = vsel %vm76, %v163, %v174
    %v177 = vsel %vm76, %v167, %v175
    %v180 = vsub.f32 %v115, %v176
    %v181 = vsub.f32 %v116, %v177
    %v182 = vmul.f32 %v61, %v180
    %v183 = vmul.f32 %v62, %v181
    %186 = vst [vmem:[#allocation1] ss:$2 sm:$0xff] %v182
    %v187 = vld.sshfl [vmem:[#allocation1] sm:$0xff pattern:$0x75316420]
    %v188 = vld.sshfl [vmem:[#allocation1 + $0x8] sm:$0xff pattern:$0x75316420]
    %s189 = scalar_lea.vmem [#allocation1], 16
    %190 = vst [vmem:[%s189] ss:$2 sm:$0xff] %v183
    %v191 = vld.sshfl [vmem:[#allocation1 + $0x10] sm:$0xff pattern:$0x75316420]
    %v192 = vld.sshfl [vmem:[#allocation1 + $0x18] sm:$0xff pattern:$0x75316420]
    %v197 = vsel %vm76, %v187, 0.0
    %v198 = vsel %vm76, %v188, 0.0
    %v199 = vadd.f32 %v197, %v198
    %200 = vadd.xlane.f32.xlu0 %v199
    %v201 = vpop.xlane.xlu0 %200
    %v202 = vsel %vm76, %v191, 0.0
    %v203 = vsel %vm76, %v192, 0.0
    %v204 = vadd.f32 %v202, %v203
    %205 = vadd.xlane.f32.xlu0 %v204
    %v206 = vpop.xlane.xlu0 %205
    %v207 = vsel %vm76, %v201, 0.0
    %v208 = vrot.slane %v207, 4
    %v209 = vadd.f32 %v207, %v208
    %v210 = vrot.slane %v209, 2
    %v211 = vadd.f32 %v209, %v210
    %v212 = vrot.slane %v211, 1
    %v213 = vadd.f32 %v211, %v212
    %v214 = vsel %vm76, %v206, 0.0
    %v215 = vrot.slane %v214, 4
    %v216 = vadd.f32 %v214, %v215
    %v217 = vrot.slane %v216, 2
    %v218 = vadd.f32 %v216, %v217
    %v219 = vrot.slane %v218, 1
    %v220 = vadd.f32 %v218, %v219
    %v221 = vsub.f32 0.0, %v213
    %v222 = vsub.f32 0.0, %v220
    %v223 = vmul.f32 %v221, 0.001953125
    %v224 = vmul.f32 %v222, 0.001953125
    %v225 = vmul.f32 %v59, 0.5
    %v226 = vmul.f32 %v60, 0.5
    %v227 = vtanh.pop %v225
    %v228 = vtanh.pop %v226
    %v229 = vmul.f32 %v227, 0.5
    %v230 = vmul.f32 %v228, 0.5
    %v231 = vadd.f32 %v229, 0.5
    %v232 = vadd.f32 %v230, 0.5
    %v233 = vmul.f32 %v231, %v61
    %v234 = vmul.f32 %v232, %v62
    %237 = vst [vmem:[#allocation1] ss:$2 sm:$0xff] %v233
    %v238 = vld.sshfl [vmem:[#allocation1] sm:$0xff pattern:$0x75316420]
    %v239 = vld.sshfl [vmem:[#allocation1 + $0x8] sm:$0xff pattern:$0x75316420]
    %s240 = scalar_lea.vmem [#allocation1], 16
    %241 = vst [vmem:[%s240] ss:$2 sm:$0xff] %v234
    %v242 = vld.sshfl [vmem:[#allocation1 + $0x10] sm:$0xff pattern:$0x75316420]
    %v243 = vld.sshfl [vmem:[#allocation1 + $0x18] sm:$0xff pattern:$0x75316420]
    %v248 = vsel %vm76, %v238, 0.0
    %v249 = vsel %vm76, %v239, 0.0
    %v250 = vadd.f32 %v248, %v249
    %251 = vadd.xlane.f32.xlu0 %v250
    %v252 = vpop.xlane.xlu0 %251
    %v253 = vsel %vm76, %v242, 0.0
    %v254 = vsel %vm76, %v243, 0.0
    %v255 = vadd.f32 %v253, %v254
    %256 = vadd.xlane.f32.xlu0 %v255
    %v257 = vpop.xlane.xlu0 %256
    %v258 = vsel %vm76, %v252, 0.0
    %v259 = vrot.slane %v258, 4
    %v260 = vadd.f32 %v258, %v259
    %v261 = vrot.slane %v260, 2
    %v262 = vadd.f32 %v260, %v261
    %v263 = vrot.slane %v262, 1
    %v264 = vadd.f32 %v262, %v263
    %v265 = vsel %vm76, %v257, 0.0
    %v266 = vrot.slane %v265, 4
    %v267 = vadd.f32 %v265, %v266
    %v268 = vrot.slane %v267, 2
    %v269 = vadd.f32 %v267, %v268
    %v270 = vrot.slane %v269, 1
    %v271 = vadd.f32 %v269, %v270
    %274 = vst [vmem:[#allocation1] ss:$2 sm:$0xff] %v231
    %v275 = vld.sshfl [vmem:[#allocation1] sm:$0xff pattern:$0x75316420]
    %v276 = vld.sshfl [vmem:[#allocation1 + $0x8] sm:$0xff pattern:$0x75316420]
    %s277 = scalar_lea.vmem [#allocation1], 16
    %278 = vst [vmem:[%s277] ss:$2 sm:$0xff] %v232
    %v279 = vld.sshfl [vmem:[#allocation1 + $0x10] sm:$0xff pattern:$0x75316420]
    %v280 = vld.sshfl [vmem:[#allocation1 + $0x18] sm:$0xff pattern:$0x75316420]
    %v285 = vsel %vm76, %v275, 0.0
    %v286 = vsel %vm76, %v276, 0.0
    %v287 = vadd.f32 %v285, %v286
    %288 = vadd.xlane.f32.xlu0 %v287
    %v289 = vpop.xlane.xlu0 %288
    %v290 = vsel %vm76, %v279, 0.0
    %v291 = vsel %vm76, %v280, 0.0
    %v292 = vadd.f32 %v290, %v291
    %293 = vadd.xlane.f32.xlu0 %v292
    %v294 = vpop.xlane.xlu0 %293
    %v295 = vsel %vm76, %v289, 0.0
    %v296 = vrot.slane %v295, 4
    %v297 = vadd.f32 %v295, %v296
    %v298 = vrot.slane %v297, 2
    %v299 = vadd.f32 %v297, %v298
    %v300 = vrot.slane %v299, 1
    %v301 = vadd.f32 %v299, %v300
    %v302 = vsel %vm76, %v294, 0.0
    %v303 = vrot.slane %v302, 4
    %v304 = vadd.f32 %v302, %v303
    %v305 = vrot.slane %v304, 2
    %v306 = vadd.f32 %v304, %v305
    %v307 = vrot.slane %v306, 1
    %v308 = vadd.f32 %v306, %v307
    %311 = vst [vmem:[#allocation1] ss:$2 sm:$0xff] %v61
    %v312 = vld.sshfl [vmem:[#allocation1] sm:$0xff pattern:$0x75316420]
    %v313 = vld.sshfl [vmem:[#allocation1 + $0x8] sm:$0xff pattern:$0x75316420]
    %s314 = scalar_lea.vmem [#allocation1], 16
    %315 = vst [vmem:[%s314] ss:$2 sm:$0xff] %v62
    %v316 = vld.sshfl [vmem:[#allocation1 + $0x10] sm:$0xff pattern:$0x75316420]
    %v317 = vld.sshfl [vmem:[#allocation1 + $0x18] sm:$0xff pattern:$0x75316420]
    %v322 = vsel %vm76, %v312, 0.0
    %v323 = vsel %vm76, %v313, 0.0
    %v324 = vadd.f32 %v322, %v323
    %325 = vadd.xlane.f32.xlu0 %v324
    %v326 = vpop.xlane.xlu0 %325
    %v327 = vsel %vm76, %v316, 0.0
    %v328 = vsel %vm76, %v317, 0.0
    %v329 = vadd.f32 %v327, %v328
    %330 = vadd.xlane.f32.xlu0 %v329
    %v331 = vpop.xlane.xlu0 %330
    %v332 = vsel %vm76, %v326, 0.0
    %v333 = vrot.slane %v332, 4
    %v334 = vadd.f32 %v332, %v333
    %v335 = vrot.slane %v334, 2
    %v336 = vadd.f32 %v334, %v335
    %v337 = vrot.slane %v336, 1
    %v338 = vadd.f32 %v336, %v337
    %v339 = vsel %vm76, %v331, 0.0
    %v340 = vrot.slane %v339, 4
    %v341 = vadd.f32 %v339, %v340
    %v342 = vrot.slane %v341, 2
    %v343 = vadd.f32 %v341, %v342
    %v344 = vrot.slane %v343, 1
    %v345 = vadd.f32 %v343, %v344
    %p346 = scmp.eq.s32.totalorder 0, 0
    // Predicated region
    $region18: #{tpu_custom_call.1} parent=1 // pred_check
      %p347 = pneg %p346
    $region19: #{tpu_custom_call.1} parent=1 // pred_check_branch
      %349 = sbr.rel (%p347) target = $region21
    $region20: #{tpu_custom_call.1} parent=1 // pred_region
      %vm350 = vcmask 1024
      %351 = vst.msk [vmem:[%s2] sm:$0x3] %vm350, 0.0
      %352 = vst.msk [vmem:[%s3] sm:$0x3] %vm350, 0.0
      %353 = vst.msk [vmem:[%s4] sm:$0x3] %vm350, 0.0
      %354 = vst.msk [vmem:[%s5] sm:$0x3] %vm350, 0.0
    $region21: #{tpu_custom_call.1} parent=1 // pred_fallthru
      _
    %v355 = vld [vmem:[%s2] sm:$0x3]
    %vm358 = vcmask 1041409
    %v359 = vsel %vm358, %v224, %v223
    %v361 = vadd.f32 %v355, %v359
    %vm362 = vcmask 1024
    %363 = vst.msk [vmem:[%s2] sm:$0x3] %vm362, %v361
    %v364 = vld [vmem:[%s3] sm:$0x3]
    %v367 = vsel %vm358, %v271, %v264
    %v369 = vadd.f32 %v364, %v367
    %370 = vst.msk [vmem:[%s3] sm:$0x3] %vm362, %v369
    %v371 = vld [vmem:[%s4] sm:$0x3]
    %v374 = vsel %vm358, %v308, %v301
    %v376 = vadd.f32 %v371, %v374
    %377 = vst.msk [vmem:[%s4] sm:$0x3] %vm362, %v376
    %v378 = vld [vmem:[%s5] sm:$0x3]
    %v381 = vsel %vm358, %v345, %v338
    %v383 = vadd.f32 %v378, %v381
    %384 = vst.msk [vmem:[%s5] sm:$0x3] %vm362, %v383
    // Predicated region
    $region22: #{tpu_custom_call.1} parent=1 // pred_check
      _
    $region23: #{tpu_custom_call.1} parent=1 // pred_check_branch
      %386 = sbr.rel (0) target = $region25
    $region24: #{tpu_custom_call.1} parent=1 // pred_region
      _
    $region25: #{tpu_custom_call.1} parent=1 // pred_fallthru
      _
    // Predicated region
    $region26: #{tpu_custom_call.1} parent=1 // pred_check
      _
    $region27: #{tpu_custom_call.1} parent=1 // pred_check_branch
      %388 = sbr.rel (0) target = $region29
    $region28: #{tpu_custom_call.1} parent=1 // pred_region
      _
    $region29: #{tpu_custom_call.1} parent=1 // pred_fallthru
      _
    // Predicated region
    $region30: #{tpu_custom_call.1} parent=1 // pred_check
      _
    $region31: #{tpu_custom_call.1} parent=1 // pred_check_branch
      %390 = sbr.rel (0) target = $region33
    $region32: #{tpu_custom_call.1} parent=1 // pred_region
      _
    $region33: #{tpu_custom_call.1} parent=1 // pred_fallthru
      _
    // Predicated region
    $region34: #{tpu_custom_call.1} parent=1 // pred_check
      _
    $region35: #{tpu_custom_call.1} parent=1 // pred_check_branch
      %392 = sbr.rel (0) target = $region37
    $region36: #{tpu_custom_call.1} parent=1 // pred_region
      _
    $region37: #{tpu_custom_call.1} parent=1 // pred_fallthru
      _
    // Predicated region
    $region38: #{tpu_custom_call.1} parent=1 // pred_check
      _
    $region39: #{tpu_custom_call.1} parent=1 // pred_check_branch
      %394 = sbr.rel (0) target = $region41
    $region40: #{tpu_custom_call.1} parent=1 // pred_region
      _
    $region41: #{tpu_custom_call.1} parent=1 // pred_fallthru
      _
    // Predicated region
    $region42: #{tpu_custom_call.1} parent=1 // pred_check
      _
    $region43: #{tpu_custom_call.1} parent=1 // pred_check_branch
      %396 = sbr.rel (0) target = $region45
    $region44: #{tpu_custom_call.1} parent=1 // pred_region
      _
    $region45: #{tpu_custom_call.1} parent=1 // pred_fallthru
      _
    // Predicated region
    $region46: #{tpu_custom_call.1} parent=1 // pred_check
      _
    $region47: #{tpu_custom_call.1} parent=1 // pred_check_branch
      %398 = sbr.rel (0) target = $region49
    $region48: #{tpu_custom_call.1} parent=1 // pred_region
      _
    $region49: #{tpu_custom_call.1} parent=1 // pred_fallthru
      _
    // Predicated region
    $region50: #{tpu_custom_call.1} parent=1 // pred_check
      _
    $region51: #{tpu_custom_call.1} parent=1 // pred_check_branch
      %400 = sbr.rel (0) target = $region53
    $region52: #{tpu_custom_call.1} parent=1 // pred_region
      _
    $region53: #{tpu_custom_call.1} parent=1 // pred_fallthru
      _
    %401 = vsyncpa [#allocation3], 1
    %402 = vsyncpa [#allocation5], 1

</llo_original>
